<compile_context>
chip_gen: v5e
topology: v5e:2x2
jax: 0.10.0
libtpu: 0.0.40
codegen_flags: <defaults>
</compile_context>

<pallas_src>
import functools
import math
from typing import NamedTuple, Optional

import jax
import jax.numpy as jnp
from jax import lax
from jax.experimental import pallas as pl
from jax.experimental.pallas import tpu as pltpu

_INV_SQRT2 = 1.0 / math.sqrt(2.0)
_SQRT_2_OVER_PI = math.sqrt(2.0 / math.pi)


def _round_up(x: int, m: int) -> int:
    return ((x + m - 1) // m) * m


def _vmem_capacity_bytes() -> int:
    """Physical VMEM per TensorCore; conservative fallback if unavailable."""
    try:
        cap = int(getattr(pltpu.get_tpu_info(), "vmem_capacity_bytes", 0))
        if cap > 0:
            return cap
    except Exception:
        pass
    return 64 * 1024 * 1024  # v7x-sized fallback (safe on v5e/v6e too)


# ----------------------------------------------------------------------------
# Kernel
# ----------------------------------------------------------------------------
def _ffn_kernel(x_ref, w1_ref, b1_ref, w2_ref, b2_ref, o_ref, acc_ref,
                *, approximate_gelu: bool):
    # Grid: (m_tiles, f_tiles); axis 1 (d_ffn blocks) is the reduction axis.
    f = pl.program_id(1)

    @pl.when(f == 0)
    def _init():
        acc_ref[...] = jnp.zeros_like(acc_ref)

    # Cast the activation tile to the MXU-native compute dtype in-kernel
    # (x is streamed from HBM in its original dtype -> no wrapper-side copy).
    xb = x_ref[...].astype(w1_ref.dtype)

    # linear1 block: (tm, d_tok_p) @ (d_tok_p, tf) -> f32 on the MXU.
    h = jnp.dot(xb, w1_ref[...], preferred_element_type=jnp.float32)
    h = h + b1_ref[...]                                   # bias kept in f32

    if approximate_gelu:
        # tanh-approx GELU: tanh goes to the EUP slot, freeing the VALU.
        inner = _SQRT_2_OVER_PI * (h + 0.044715 * (h * h * h))
        h = 0.5 * h * (1.0 + jnp.tanh(inner))
    else:
        # Exact erf GELU -- matches PyTorch's default nn.GELU().
        h = 0.5 * h * (1.0 + lax.erf(h * _INV_SQRT2))

    # linear2 partial product: (tm, tf) @ (tf, d_tok_p), accumulate in f32.
    acc_ref[...] += jnp.dot(h.astype(w2_ref.dtype), w2_ref[...],
                            preferred_element_type=jnp.float32)

    @pl.when(f == pl.num_programs(1) - 1)
    def _finalize():
        o_ref[...] = (acc_ref[...] + b2_ref[...]).astype(o_ref.dtype)


# ----------------------------------------------------------------------------
# One-time weight preparation (hoisted out of the per-call path)
# ----------------------------------------------------------------------------
class FFNParams(NamedTuple):
    w1t: jax.Array     # (d_tok_p, d_ffn_p), compute dtype (W1^T, padded)
    b1r: jax.Array     # (1, d_ffn_p), f32
    w2t: jax.Array     # (d_ffn_p, d_tok_p), compute dtype (W2^T, padded)
    b2r: jax.Array     # (1, d_tok_p), f32
    d_token: int
    d_ffn: int
    tf: int            # d_ffn (reduction) block size
    vmem_target: int   # per-generation VMEM working-set target (bytes)


def prepare_params(w1, b1, w2, b2, *, compute_dtype=jnp.bfloat16,
                   tf: Optional[int] = None,
                   vmem_target: Optional[int] = None) -> FFNParams:
    """Transpose to matmul layout, pad lane dims to 128-multiples, cast the
    weight matrices to the MXU compute dtype (biases stay f32).  Call once.

    w1: (d_ffn, d_token), b1: (d_ffn,)   -- PyTorch nn.Linear layout
    w2: (d_token, d_ffn), b2: (d_token,)
    """
    d_ffn, d_token = w1.shape
    assert w2.shape == (d_token, d_ffn)

    if vmem_target is None:
        vmem_target = int(_vmem_capacity_bytes() * 3 // 4)

    d_tok_p = _round_up(d_token, 128)
    d_ffn_128 = _round_up(d_ffn, 128)
    cs = jnp.dtype(compute_dtype).itemsize

    if tf is None:
        # Prefer a fully-resident d_ffn block (weights fetched once); else the
        # largest 128-multiple whose double-buffered W1+W2 blocks fit ~half of
        # the per-generation VMEM target.
        weight_budget = vmem_target // 2
        tf = 128
        for cand in (d_ffn_128, 2048, 1024, 512, 256, 128):
            cand = min(_round_up(cand, 128), d_ffn_128)
            if 2 * 2 * d_tok_p * cand * cs <= weight_budget:
                tf = cand
                break
    tf = min(_round_up(max(tf, 128), 128), d_ffn_128)
    d_ffn_p = _round_up(d_ffn, tf)

    w1t = jnp.pad(jnp.asarray(w1).T.astype(compute_dtype),
                  ((0, d_tok_p - d_token), (0, d_ffn_p - d_ffn)))
    w2t = jnp.pad(jnp.asarray(w2).T.astype(compute_dtype),
                  ((0, d_ffn_p - d_ffn), (0, d_tok_p - d_token)))
    b1r = jnp.pad(jnp.asarray(b1).astype(jnp.float32),
                  (0, d_ffn_p - d_ffn)).reshape(1, d_ffn_p)
    b2r = jnp.pad(jnp.asarray(b2).astype(jnp.float32),
                  (0, d_tok_p - d_token)).reshape(1, d_tok_p)
    return FFNParams(w1t, b1r, w2t, b2r, int(d_token), int(d_ffn),
                     int(tf), int(vmem_target))


# ----------------------------------------------------------------------------
# Forward pass
# ----------------------------------------------------------------------------
def feed_forward(x, params: FFNParams, *, tm: Optional[int] = None,
                 approximate_gelu: bool = False):
    """Eval-mode FeedForward forward pass: linear1 -> GELU -> linear2.

    x: (B, S, d_token) -> (B, S, d_token)
    """
    B, S, d_token = x.shape
    assert d_token == params.d_token, "x last dim must match prepared params"
    M = B * S
    out_dtype = x.dtype

    w1t, b1r, w2t, b2r = params.w1t, params.b1r, params.w2t, params.b2r
    d_tok_p, d_ffn_p = w1t.shape
    tf = params.tf
    vmem_target = params.vmem_target

    cs = jnp.dtype(w1t.dtype).itemsize      # weight / compute dtype bytes
    xs = jnp.dtype(x.dtype).itemsize        # x streamed in its own dtype
    os_ = jnp.dtype(out_dtype).itemsize

    # Double-buffered weight / bias block footprint.
    weight_fp = 2 * 2 * d_tok_p * tf * cs + 2 * (tf + d_tok_p) * 4
    remaining = max(vmem_target - weight_fp, 8 * 1024 * 1024)

    # Largest m tile whose working set (x tile + out tile double-buffered,
    # f32 accumulator, f32 intermediate h) fits the per-generation remainder.
    if tm is None:
        tm = 128
        for cand in (1024, 512, 256, 128):
            fp = (2 * cand * d_tok_p * xs + 2 * cand * d_tok_p * os_
                  + cand * d_tok_p * 4 + cand * tf * 4)
            if fp <= remaining:
                tm = cand
                break
    tm = max(128, _round_up(tm, 128))
    tm = min(tm, max(128, _round_up(M, 128)))   # don't over-pad small M
    M_p = _round_up(M, tm)

    grid = (M_p // tm, d_ffn_p // tf)
    m_tiles = grid[0]
    weights_resident = (grid[1] == 1)           # constant block idx -> DMA'd once

    # x stays in its original dtype; only reshape / zero-pad (no bf16 copy).
    x_p = jnp.pad(x.reshape(M, d_token),
                  ((0, M_p - M), (0, d_tok_p - d_token)))

    tile_fp = (2 * tm * d_tok_p * xs + 2 * tm * d_tok_p * os_
               + tm * d_tok_p * 4 + tm * tf * 4)
    footprint = weight_fp + tile_fp
    vmem_limit = int(min(max(footprint + footprint // 4 + (4 << 20), 32 << 20),
                         vmem_target + (8 << 20)))

    # Actual DMA traffic: weights re-streamed once per m-tile unless resident.
    weight_reads = 1 if weights_resident else m_tiles
    cost = pl.CostEstimate(
        flops=int(4 * M_p * d_tok_p * d_ffn_p),                  # two matmuls
        transcendentals=int(M_p * d_ffn_p),                      # erf / tanh
        bytes_accessed=int(x_p.size * xs + M_p * d_tok_p * os_
                           + weight_reads * ((w1t.size + w2t.size) * cs
                                             + (b1r.size + b2r.size) * 4)),
    )

    kernel = functools.partial(_ffn_kernel, approximate_gelu=approximate_gelu)

    # TODO(synk): on v7x, single-buffer the resident weight blocks
    # (pipeline_mode=pl.Buffered(1)) to halve their VMEM footprint; omitted
    # here to keep lowering portable across JAX versions.
    out = pl.pallas_call(
        kernel,
        out_shape=jax.ShapeDtypeStruct((M_p, d_tok_p), out_dtype),
        grid_spec=pltpu.PrefetchScalarGridSpec(
            num_scalar_prefetch=0,
            grid=grid,
            in_specs=[
                pl.BlockSpec((tm, d_tok_p), lambda m, f: (m, 0)),   # x tile
                pl.BlockSpec((d_tok_p, tf), lambda m, f: (0, f)),   # W1^T block
                pl.BlockSpec((1, tf), lambda m, f: (0, f)),         # b1 block
                pl.BlockSpec((tf, d_tok_p), lambda m, f: (f, 0)),   # W2^T block
                pl.BlockSpec((1, d_tok_p), lambda m, f: (0, 0)),    # b2
            ],
            out_specs=pl.BlockSpec((tm, d_tok_p), lambda m, f: (m, 0)),
            scratch_shapes=[pltpu.VMEM((tm, d_tok_p), jnp.float32)],
        ),
        compiler_params=pltpu.CompilerParams(
            dimension_semantics=("parallel", "arbitrary"),
            vmem_limit_bytes=vmem_limit),
        cost_estimate=cost,
    )(x_p, w1t, b1r, w2t, b2r)

    # TODO(synk): nn.Dropout is identity in eval/inference mode; training-mode
    # dropout (pltpu.prng_seed + prng_random_bits mask + 1/(1-p) scale) is not
    # implemented here.
    return out[:M, :d_token].reshape(B, S, d_token)


def feed_forward_torch_layout(x, w1, b1, w2, b2, **kw):
    """One-shot convenience wrapper (pays weight prep each call — prefer
    prepare_params() once + feed_forward() inside loops)."""
    prep_kw = {k: kw.pop(k) for k in ("compute_dtype", "tf", "vmem_target")
               if k in kw}
    return feed_forward(x, prepare_params(w1, b1, w2, b2, **prep_kw), **kw)


# ----------------------------------------------------------------------------
# Init + pure-JAX reference (PyTorch eval-mode semantics)
# ----------------------------------------------------------------------------
def init_params(key, d_token, d_ffn, dtype=jnp.float32):
    """Matches the PyTorch module's init: kaiming_normal_(fan_in, relu)
       -> std = sqrt(2/fan_in); biases = 0."""
    k1, k2 = jax.random.split(key)
    std1 = math.sqrt(2.0 / d_token)   # linear1: fan_in = d_token
    std2 = math.sqrt(2.0 / d_ffn)     # linear2: fan_in = d_ffn
    w1 = std1 * jax.random.normal(k1, (d_ffn, d_token), dtype)   # (out, in)
    w2 = std2 * jax.random.normal(k2, (d_token, d_ffn), dtype)
    b1 = jnp.zeros((d_ffn,), dtype)
    b2 = jnp.zeros((d_token,), dtype)
    return w1, b1, w2, b2


def _reference(x, w1, b1, w2, b2, compute_dtype=jnp.float32,
               approximate_gelu=False):
    cd = compute_dtype
    h = jnp.dot(x.astype(cd), w1.T.astype(cd),
                preferred_element_type=jnp.float32) + b1.astype(jnp.float32)
    if approximate_gelu:
        h = 0.5 * h * (1.0 + jnp.tanh(_SQRT_2_OVER_PI * (h + 0.044715 * h ** 3)))
    else:
        h = 0.5 * h * (1.0 + lax.erf(h * _INV_SQRT2))
    y = jnp.dot(h.astype(cd), w2.T.astype(cd),
                preferred_element_type=jnp.float32) + b2.astype(jnp.float32)
    return y.astype(x.dtype)


if __name__ == "__main__":
    key = jax.random.PRNGKey(0)
    kx1, kp1, kx2, kp2 = jax.random.split(key, 4)

    # --- case 1: small shapes consistent with the module ---------------------
    B, S, d_token, d_ffn = 2, 8, 32, 64
    x = jax.random.normal(kx1, (B, S, d_token), jnp.float32)
    w1, b1, w2, b2 = init_params(kp1, d_token, d_ffn)
    params = prepare_params(w1, b1, w2, b2)        # one-time weight prep

    y = feed_forward(x, params)
    jax.block_until_ready(y)
    assert y.shape == (B, S, d_token)

    # Same-precision (bf16-operand, f32-accumulate) reference: tight check.
    y_ref_bf16 = _reference(x, w1, b1, w2, b2, jnp.bfloat16)
    assert jnp.allclose(y, y_ref_bf16, atol=1e-2, rtol=1e-2), \
        "mismatch vs bf16-operand reference"
    # Full-f32 reference (PyTorch numerics): relative-norm check (bf16 MXU).
    y_ref_f32 = _reference(x, w1, b1, w2, b2, jnp.float32)
    rel = (jnp.linalg.norm((y - y_ref_f32).astype(jnp.float32))
           / jnp.linalg.norm(y_ref_f32.astype(jnp.float32)))
    assert float(rel) < 3e-2, f"relative error vs f32 reference too large: {rel}"

    # tanh-approx GELU perf variant (v6e/v7x VALU relief) — numerics check.
    y_tanh = feed_forward(x, params, approximate_gelu=True)
    jax.block_until_ready(y_tanh)
    y_tanh_ref = _reference(x, w1, b1, w2, b2, jnp.bfloat16, approximate_gelu=True)
    assert jnp.allclose(y_tanh, y_tanh_ref, atol=1e-2, rtol=1e-2), \
        "mismatch vs tanh-GELU reference"

    # --- case 2: non-multiple shapes, multi-step grid on both axes -----------
    B2, S2, d_token2, d_ffn2 = 4, 40, 48, 192
    x2 = jax.random.normal(kx2, (B2, S2, d_token2), jnp.float32)
    p2 = init_params(kp2, d_token2, d_ffn2)
    params2 = prepare_params(*p2, tf=128)          # force 2 reduction steps
    y2 = feed_forward(x2, params2, tm=128)         # grid (2, 2), padded tails
    jax.block_until_ready(y2)
    assert y2.shape == (B2, S2, d_token2)
    y2_ref = _reference(x2, *p2, jnp.bfloat16)
    assert jnp.allclose(y2, y2_ref, atol=1e-2, rtol=1e-2), \
        "mismatch vs reference (tiled / padded case)"

    print("KERNEL_OK")
</pallas_src>

<mosaic_0001>
module attributes {stable_mosaic.version = 11 : i64} {
  func.func @_ffn_kernel(%arg0: i32, %arg1: i32, %arg2: memref<128x128xf32, #tpu.memory_space<vmem>>, %arg3: memref<128x128xbf16, #tpu.memory_space<vmem>>, %arg4: memref<1x128xf32, #tpu.memory_space<vmem>>, %arg5: memref<128x128xbf16, #tpu.memory_space<vmem>>, %arg6: memref<1x128xf32, #tpu.memory_space<vmem>>, %arg7: memref<128x128xf32, #tpu.memory_space<vmem>>, %arg8: memref<128x128xf32, #tpu.memory_space<vmem>>) attributes {dimension_semantics = [#tpu.dimension_semantics<parallel>, #tpu.dimension_semantics<arbitrary>], iteration_bounds = array<i64: 1, 1>, scalar_prefetch = 0 : i64, scratch_operands = 1 : i64, tpu.core_type = #tpu.core_type<tc>, window_params = [{transform_indices = @transform_0, window_bounds = array<i64: 128, 128>}, {transform_indices = @transform_1, window_bounds = array<i64: 128, 128>}, {transform_indices = @transform_2, window_bounds = array<i64: 1, 128>}, {transform_indices = @transform_3, window_bounds = array<i64: 128, 128>}, {pipeline_mode = #tpu.pipeline_mode<synchronous>, transform_indices = @transform_4, window_bounds = array<i64: 1, 128>}, {transform_indices = @transform_5, window_bounds = array<i64: 128, 128>}]} {
    %c0_i32 = arith.constant 0 : i32
    %0 = arith.cmpi eq, %arg1, %c0_i32 : i32
    %1 = arith.extui %0 : i1 to i32
    %c0_i32_0 = arith.constant 0 : i32
    %2 = arith.cmpi ne, %1, %c0_i32_0 : i32
    scf.if %2 {
      %cst_18 = arith.constant 0.000000e+00 : f32
      %27 = vector.broadcast %cst_18 : f32 to vector<128x128xf32>
      %c0_19 = arith.constant 0 : index
      %c0_20 = arith.constant 0 : index
      %28 = vector.load %arg8[%c0_19, %c0_20] : memref<128x128xf32, #tpu.memory_space<vmem>>, vector<128x128xf32>
      tpu.vector_store %arg8[%c0_19, %c0_20], %27 {strides = array<i32>} : memref<128x128xf32, #tpu.memory_space<vmem>>, vector<128x128xf32>,
    } else {
    }
    %c0 = arith.constant 0 : index
    %c0_1 = arith.constant 0 : index
    %3 = vector.load %arg2[%c0, %c0_1] : memref<128x128xf32, #tpu.memory_space<vmem>>, vector<128x128xf32>
    %4 = arith.truncf %3 : vector<128x128xf32> to vector<128x128xbf16>
    %c0_2 = arith.constant 0 : index
    %c0_3 = arith.constant 0 : index
    %5 = vector.load %arg3[%c0_2, %c0_3] : memref<128x128xbf16, #tpu.memory_space<vmem>>, vector<128x128xbf16>
    %cst = arith.constant dense<0.000000e+00> : vector<128x128xf32>
    %6 = tpu.matmul %4, %5, %cst {dimension_numbers = #tpu.dot_dimension_numbers<[1], [0], [0], [1], [0, 0, 1, 1], [], []>} : vector<128x128xbf16>, vector<128x128xbf16>, vector<128x128xf32> -> vector<128x128xf32>
    %c0_4 = arith.constant 0 : index
    %c0_5 = arith.constant 0 : index
    %7 = vector.load %arg4[%c0_4, %c0_5] : memref<1x128xf32, #tpu.memory_space<vmem>>, vector<1x128xf32>
    %8 = vector.broadcast %7 : vector<1x128xf32> to vector<128x128xf32>
    %9 = arith.addf %6, %8 : vector<128x128xf32>
    %cst_6 = arith.constant 5.000000e-01 : f32
    %10 = vector.broadcast %cst_6 : f32 to vector<128x128xf32>
    %11 = arith.mulf %10, %9 : vector<128x128xf32>
    %cst_7 = arith.constant 0.707106769 : f32
    %12 = vector.broadcast %cst_7 : f32 to vector<128x128xf32>
    %13 = arith.mulf %9, %12 : vector<128x128xf32>
    %14 = math.erf %13 : vector<128x128xf32>
    %cst_8 = arith.constant 1.000000e+00 : f32
    %15 = vector.broadcast %cst_8 : f32 to vector<128x128xf32>
    %16 = arith.addf %15, %14 : vector<128x128xf32>
    %17 = arith.mulf %11, %16 : vector<128x128xf32>
    %c0_9 = arith.constant 0 : index
    %c0_10 = arith.constant 0 : index
    %18 = vector.load %arg8[%c0_9, %c0_10] : memref<128x128xf32, #tpu.memory_space<vmem>>, vector<128x128xf32>
    %19 = arith.truncf %17 : vector<128x128xf32> to vector<128x128xbf16>
    %c0_11 = arith.constant 0 : index
    %c0_12 = arith.constant 0 : index
    %20 = vector.load %arg5[%c0_11, %c0_12] : memref<128x128xbf16, #tpu.memory_space<vmem>>, vector<128x128xbf16>
    %cst_13 = arith.constant dense<0.000000e+00> : vector<128x128xf32>
    %21 = tpu.matmul %19, %20, %cst_13 {dimension_numbers = #tpu.dot_dimension_numbers<[1], [0], [0], [1], [0, 0, 1, 1], [], []>} : vector<128x128xbf16>, vector<128x128xbf16>, vector<128x128xf32> -> vector<128x128xf32>
    %22 = arith.addf %18, %21 : vector<128x128xf32>
    %c0_14 = arith.constant 0 : index
    %c0_15 = arith.constant 0 : index
    %23 = vector.load %arg8[%c0_14, %c0_15] : memref<128x128xf32, #tpu.memory_space<vmem>>, vector<128x128xf32>
    tpu.vector_store %arg8[%c0_14, %c0_15], %22 {strides = array<i32>} : memref<128x128xf32, #tpu.memory_space<vmem>>, vector<128x128xf32>,
    %c0_i32_16 = arith.constant 0 : i32
    %24 = arith.cmpi eq, %arg1, %c0_i32_16 : i32
    %25 = arith.extui %24 : i1 to i32
    %c0_i32_17 = arith.constant 0 : i32
    %26 = arith.cmpi ne, %25, %c0_i32_17 : i32
    scf.if %26 {
      %c0_18 = arith.constant 0 : index
      %c0_19 = arith.constant 0 : index
      %27 = vector.load %arg8[%c0_18, %c0_19] : memref<128x128xf32, #tpu.memory_space<vmem>>, vector<128x128xf32>
      %c0_20 = arith.constant 0 : index
      %c0_21 = arith.constant 0 : index
      %28 = vector.load %arg6[%c0_20, %c0_21] : memref<1x128xf32, #tpu.memory_space<vmem>>, vector<1x128xf32>
      %29 = vector.broadcast %28 : vector<1x128xf32> to vector<128x128xf32>
      %30 = arith.addf %27, %29 : vector<128x128xf32>
      %c0_22 = arith.constant 0 : index
      %c0_23 = arith.constant 0 : index
      %31 = vector.load %arg7[%c0_22, %c0_23] : memref<128x128xf32, #tpu.memory_space<vmem>>, vector<128x128xf32>
      tpu.vector_store %arg7[%c0_22, %c0_23], %30 {strides = array<i32>} : memref<128x128xf32, #tpu.memory_space<vmem>>, vector<128x128xf32>,
    } else {
    }
    return
  }
  func.func @transform_0(%arg0: i32, %arg1: i32) -> (i32, i32) {
    %c0_i32 = arith.constant 0 : i32
    %c0_i32_0 = arith.constant 0 : i32
    return %arg0, %c0_i32 : i32, i32
  }
  func.func @transform_1(%arg0: i32, %arg1: i32) -> (i32, i32) {
    %c0_i32 = arith.constant 0 : i32
    %c0_i32_0 = arith.constant 0 : i32
    return %c0_i32, %arg1 : i32, i32
  }
  func.func @transform_2(%arg0: i32, %arg1: i32) -> (i32, i32) {
    %c0_i32 = arith.constant 0 : i32
    %c0_i32_0 = arith.constant 0 : i32
    return %c0_i32, %arg1 : i32, i32
  }
  func.func @transform_3(%arg0: i32, %arg1: i32) -> (i32, i32) {
    %c0_i32 = arith.constant 0 : i32
    %c0_i32_0 = arith.constant 0 : i32
    return %arg1, %c0_i32 : i32, i32
  }
  func.func @transform_4(%arg0: i32, %arg1: i32) -> (i32, i32) {
    %c0_i32 = arith.constant 0 : i32
    %c0_i32_0 = arith.constant 0 : i32
    %c0_i32_1 = arith.constant 0 : i32
    return %c0_i32, %c0_i32_0 : i32, i32
  }
  func.func @transform_5(%arg0: i32, %arg1: i32) -> (i32, i32) {
    %c0_i32 = arith.constant 0 : i32
    %c0_i32_0 = arith.constant 0 : i32
    return %arg0, %c0_i32 : i32, i32
  }
}

</mosaic_0001>

<llo_original>
// kernel: tpu_custom_call.1
$region0: #{tpu_custom_call.1}
  #allocation0 [shape = 'u32[]', space=smem, size = 0x4, offset = 0x4, fixed_abs, tag = 'smem constant byte address 0x4 - core index']
  #allocation1 [shape = 'u32[72,128]{1,0:T(1,128)}', space=vmem, size = 0x9000, scoped, tag = 'internal scratch']
  #allocation2 [shape = 'f32[128,128]{1,0:T(8,128)}', space=vmem, size = 0x10000, scoped, tag = 'scratch operand']
  %s0 = inlined_call_operand.hbm [shape: f32[128,128], index: 0, kind: input, shape index: {}]
  %s1 = inlined_call_operand.hbm [shape: bf16[128,128], index: 1, kind: input, shape index: {}]
  %s2 = inlined_call_operand.vmem [shape: f32[1,128], index: 2, kind: input, shape index: {}]
  %s3 = inlined_call_operand.hbm [shape: bf16[128,128], index: 3, kind: input, shape index: {}]
  %s4 = inlined_call_operand.vmem [shape: f32[1,128], index: 4, kind: input, shape index: {}]
  %s5 = inlined_call_operand.hbm [shape: f32[128,128], index: 5, kind: output, shape index: {}]
  %s6 = sld [smem:[#allocation0]]
  $region50: #{tpu_custom_call.1} parent=0
    _
  %s8 = ssub.s32 1, %s6
  %s9 = scalar_select 0, %s8, %s6
  $region1: #{tpu_custom_call.1} parent=0
    #allocation3 [shape = 'u8[65536]{0}', space=vmem, size = 0x10000, scoped, tag = 'input window, operand 0, single buffered']
    #allocation4 [shape = 's32[1]{0}', space=sflag, size = 0x4, scoped, tag = 'scoped memory for tpu_custom_call.1']
    #allocation5 [shape = 's32[1]{0}', space=sflag, size = 0x4, scoped, tag = 'scoped memory for tpu_custom_call.1']
    #allocation6 [shape = 'u8[32768]{0}', space=vmem, size = 0x8000, scoped, tag = 'input window, operand 1, single buffered']
    #allocation7 [shape = 's32[1]{0}', space=sflag, size = 0x4, scoped, tag = 'scoped memory for tpu_custom_call.1']
    #allocation8 [shape = 'u8[32768]{0}', space=vmem, size = 0x8000, scoped, tag = 'input window, operand 3, single buffered']
    #allocation9 [shape = 'u8[65536]{0}', space=vmem, size = 0x10000, scoped, tag = 'output window, operand 0, single buffered']
    %10 = vsyncpa [#allocation4], 0
    %11 = vsyncpa [#allocation7], 0
    %12 = vsyncpa [#allocation5], 0
    // Predicated region
    $region2: #{tpu_custom_call.1} parent=1 // pred_check
      _
    $region3: #{tpu_custom_call.1} parent=1 // pred_check_branch
      %14 = sbr.rel (0) target = $region5
    $region4: #{tpu_custom_call.1} parent=1 // pred_region
      %16 = vsyncadd [#allocation4], 0
      %s17 = sshll.u32 %s0, 4
      %s18 = int_to_ptr.hbm [resolvable:$true] %s17
      %s19 = sshll.u32 [#allocation3], 4
      %s20 = int_to_ptr.vmem [resolvable:$true] %s19
      %25 = dma.hbm_to_vmem [thread:$0]  %s18, 2048, %s20, [#allocation4], 128, 128, 8
    $region5: #{tpu_custom_call.1} parent=1 // pred_fallthru
      _
    // Predicated region
    $region6: #{tpu_custom_call.1} parent=1 // pred_check
      _
    $region7: #{tpu_custom_call.1} parent=1 // pred_check_branch
      %27 = sbr.rel (0) target = $region9
    $region8: #{tpu_custom_call.1} parent=1 // pred_region
      %29 = vsyncadd [#allocation7], 0
      %s30 = sshll.u32 %s1, 4
      %s31 = int_to_ptr.hbm [resolvable:$true] %s30
      %s32 = sshll.u32 [#allocation6], 4
      %s33 = int_to_ptr.vmem [resolvable:$true] %s32
      %38 = dma.hbm_to_vmem [thread:$0]  %s31, 1024, %s33, [#allocation7], 64, 64, 4
    $region9: #{tpu_custom_call.1} parent=1 // pred_fallthru
      _
    // Predicated region
    $region10: #{tpu_custom_call.1} parent=1 // pred_check
      _
    $region11: #{tpu_custom_call.1} parent=1 // pred_check_branch
      %40 = sbr.rel (0) target = $region13
    $region12: #{tpu_custom_call.1} parent=1 // pred_region
      _
    $region13: #{tpu_custom_call.1} parent=1 // pred_fallthru
      _
    // Predicated region
    $region14: #{tpu_custom_call.1} parent=1 // pred_check
      _
    $region15: #{tpu_custom_call.1} parent=1 // pred_check_branch
      %42 = sbr.rel (0) target = $region17
    $region16: #{tpu_custom_call.1} parent=1 // pred_region
      %44 = vsyncadd [#allocation7], 0
      %s45 = sshll.u32 %s3, 4
      %s46 = int_to_ptr.hbm [resolvable:$true] %s45
      %s47 = sshll.u32 [#allocation8], 4
      %s48 = int_to_ptr.vmem [resolvable:$true] %s47
      %53 = dma.hbm_to_vmem [thread:$0]  %s46, 1024, %s48, [#allocation7], 64, 64, 4
    $region17: #{tpu_custom_call.1} parent=1 // pred_fallthru
      _
    // Predicated region
    $region18: #{tpu_custom_call.1} parent=1 // pred_check
      _
    $region19: #{tpu_custom_call.1} parent=1 // pred_check_branch
      %55 = sbr.rel (0) target = $region21
    $region20: #{tpu_custom_call.1} parent=1 // pred_region
      _
    $region21: #{tpu_custom_call.1} parent=1 // pred_fallthru
      _
    // Predicated region
    $region22: #{tpu_custom_call.1} parent=1 // pred_check
      _
    $region23: #{tpu_custom_call.1} parent=1 // pred_check_branch
      %57 = sbr.rel (0) target = $region25
    $region24: #{tpu_custom_call.1} parent=1 // pred_region
      %59 = dma.done [#allocation4], 2048
    $region25: #{tpu_custom_call.1} parent=1 // pred_fallthru
      _
    // Predicated region
    $region26: #{tpu_custom_call.1} parent=1 // pred_check
      _
    $region27: #{tpu_custom_call.1} parent=1 // pred_check_branch
      %61 = sbr.rel (0) target = $region29
    $region28: #{tpu_custom_call.1} parent=1 // pred_region
      %63 = dma.done [#allocation7], 1024
    $region29: #{tpu_custom_call.1} parent=1 // pred_fallthru
      _
    // Predicated region
    $region30: #{tpu_custom_call.1} parent=1 // pred_check
      _
    $region31: #{tpu_custom_call.1} parent=1 // pred_check_branch
      %65 = sbr.rel (0) target = $region33
    $region32: #{tpu_custom_call.1} parent=1 // pred_region
      %67 = dma.done [#allocation7], 1024
    $region33: #{tpu_custom_call.1} parent=1 // pred_fallthru
      _
    %p68 = scmp.eq.s32.totalorder 0, 0
    // Predicated region
    $region34: #{tpu_custom_call.1} parent=1 // pred_check
      %p69 = pneg %p68
    $region35: #{tpu_custom_call.1} parent=1 // pred_check_branch
      %71 = sbr.rel (%p69) target = $region37
    $region36: #{tpu_custom_call.1} parent=1 // pred_region
      %72 = vst [vmem:[#allocation2] sm:$0xff] 0.0
      %73 = vst [vmem:[#allocation2 + $0x8] sm:$0xff] 0.0
      %74 = vst [vmem:[#allocation2 + $0x10] sm:$0xff] 0.0
      %75 = vst [vmem:[#allocation2 + $0x18] sm:$0xff] 0.0
      %76 = vst [vmem:[#allocation2 + $0x20] sm:$0xff] 0.0
      %77 = vst [vmem:[#allocation2 + $0x28] sm:$0xff] 0.0
      %78 = vst [vmem:[#allocation2 + $0x30] sm:$0xff] 0.0
      %79 = vst [vmem:[#allocation2 + $0x38] sm:$0xff] 0.0
      %80 = vst [vmem:[#allocation2 + $0x40] sm:$0xff] 0.0
      %81 = vst [vmem:[#allocation2 + $0x48] sm:$0xff] 0.0
      %82 = vst [vmem:[#allocation2 + $0x50] sm:$0xff] 0.0
      %83 = vst [vmem:[#allocation2 + $0x58] sm:$0xff] 0.0
      %84 = vst [vmem:[#allocation2 + $0x60] sm:$0xff] 0.0
      %85 = vst [vmem:[#allocation2 + $0x68] sm:$0xff] 0.0
      %86 = vst [vmem:[#allocation2 + $0x70] sm:$0xff] 0.0
      %87 = vst [vmem:[#allocation2 + $0x78] sm:$0xff] 0.0
    $region37: #{tpu_custom_call.1} parent=1 // pred_fallthru
      _
    %v88 = vld [vmem:[#allocation3] sm:$0xff]
    %v89 = vld [vmem:[#allocation3 + $0x8] sm:$0xff]
    %v90 = vld [vmem:[#allocation3 + $0x10] sm:$0xff]
    %v91 = vld [vmem:[#allocation3 + $0x18] sm:$0xff]
    %v92 = vld [vmem:[#allocation3 + $0x20] sm:$0xff]
    %v93 = vld [vmem:[#allocation3 + $0x28] sm:$0xff]
    %v94 = vld [vmem:[#allocation3 + $0x30] sm:$0xff]
    %v95 = vld [vmem:[#allocation3 + $0x38] sm:$0xff]
    %v96 = vld [vmem:[#allocation3 + $0x40] sm:$0xff]
    %v97 = vld [vmem:[#allocation3 + $0x48] sm:$0xff]
    %v98 = vld [vmem:[#allocation3 + $0x50] sm:$0xff]
    %v99 = vld [vmem:[#allocation3 + $0x58] sm:$0xff]
    %v100 = vld [vmem:[#allocation3 + $0x60] sm:$0xff]
    %v101 = vld [vmem:[#allocation3 + $0x68] sm:$0xff]
    %v102 = vld [vmem:[#allocation3 + $0x70] sm:$0xff]
    %v103 = vld [vmem:[#allocation3 + $0x78] sm:$0xff]
    %v104 = vpack.c.bf16 %v89, %v88
    %v105 = vpack.c.bf16 %v91, %v90
    %v106 = vpack.c.bf16 %v93, %v92
    %v107 = vpack.c.bf16 %v95, %v94
    %v108 = vpack.c.bf16 %v97, %v96
    %v109 = vpack.c.bf16 %v99, %v98
    %v110 = vpack.c.bf16 %v101, %v100
    %v111 = vpack.c.bf16 %v103, %v102
    %v112 = vld [vmem:[#allocation6] sm:$0xf]
    %v113 = vld [vmem:[#allocation6 + $0x4] sm:$0xf]
    %v114 = vld [vmem:[#allocation6 + $0x8] sm:$0xf]
    %v115 = vld [vmem:[#allocation6 + $0xc] sm:$0xf]
    %v116 = vld [vmem:[#allocation6 + $0x10] sm:$0xf]
    %v117 = vld [vmem:[#allocation6 + $0x14] sm:$0xf]
    %v118 = vld [vmem:[#allocation6 + $0x18] sm:$0xf]
    %v119 = vld [vmem:[#allocation6 + $0x1c] sm:$0xf]
    %v120 = vld [vmem:[#allocation6 + $0x20] sm:$0xf]
    %v121 = vld [vmem:[#allocation6 + $0x24] sm:$0xf]
    %v122 = vld [vmem:[#allocation6 + $0x28] sm:$0xf]
    %v123 = vld [vmem:[#allocation6 + $0x2c] sm:$0xf]
    %v124 = vld [vmem:[#allocation6 + $0x30] sm:$0xf]
    %v125 = vld [vmem:[#allocation6 + $0x34] sm:$0xf]
    %v126 = vld [vmem:[#allocation6 + $0x38] sm:$0xf]
    %v127 = vld [vmem:[#allocation6 + $0x3c] sm:$0xf]
    %v128 = vld [vmem:[%s2] sm:$0x1]
    %v130 = vperm.slane %v128, 0
    %v148 = vunpack.c.l.b16 %v112
    %v149 = vunpack.c.l.b16 %v113
    %v150 = vunpack.c.l.b16 %v114
    %v151 = vunpack.c.l.b16 %v115
    %v152 = vunpack.c.l.b16 %v116
    %v153 = vunpack.c.l.b16 %v117
    %v154 = vunpack.c.l.b16 %v118
    %v155 = vunpack.c.l.b16 %v119
    %v156 = vunpack.c.l.b16 %v120
    %v157 = vunpack.c.l.b16 %v121
    %v158 = vunpack.c.l.b16 %v122
    %v159 = vunpack.c.l.b16 %v123
    %v160 = vunpack.c.l.b16 %v124
    %v161 = vunpack.c.l.b16 %v125
    %v162 = vunpack.c.l.b16 %v126
    %v163 = vunpack.c.l.b16 %v127
    %v164 = vpack.c.b16 %v149, %v148
    %v165 = vpack.c.b16 %v151, %v150
    %v166 = vpack.c.b16 %v153, %v152
    %v167 = vpack.c.b16 %v155, %v154
    %v168 = vpack.c.b16 %v157, %v156
    %v169 = vpack.c.b16 %v159, %v158
    %v170 = vpack.c.b16 %v161, %v160
    %v171 = vpack.c.b16 %v163, %v162
    %180 = vmatpush.bf16.msra.mxu0 %v171
    %181 = vmatpush.bf16.msra.mxu0 %v170
    %182 = vmatpush.bf16.msra.mxu0 %v169
    %183 = vmatpush.bf16.msra.mxu0 %v168
    %184 = vmatpush.bf16.msra.mxu0 %v167
    %185 = vmatpush.bf16.msra.mxu0 %v166
    %186 = vmatpush.bf16.msra.mxu0 %v165
    %187 = vmatpush.bf16.msra.mxu0 %v164
    %188 = vmatmul.bf16.gmra.mxu0 %v104
    %v189 = vpop.f32.mrf.mxu0
    %v190 = vadd.f32 %v130, %v189
    %v191 = vpop.f32.mrf.mxu0
    %v192 = vadd.f32 %v130, %v191
    %193 = vmatmul.bf16.gmra.mxu0 %v105
    %v194 = vpop.f32.mrf.mxu0
    %v195 = vadd.f32 %v130, %v194
    %v196 = vpop.f32.mrf.mxu0
    %v197 = vadd.f32 %v130, %v196
    %198 = vmatmul.bf16.gmra.mxu0 %v106
    %v199 = vpop.f32.mrf.mxu0
    %v200 = vadd.f32 %v130, %v199
    %v201 = vpop.f32.mrf.mxu0
    %v202 = vadd.f32 %v130, %v201
    %203 = vmatmul.bf16.gmra.mxu0 %v107
    %v204 = vpop.f32.mrf.mxu0
    %v205 = vadd.f32 %v130, %v204
    %v206 = vpop.f32.mrf.mxu0
    %v207 = vadd.f32 %v130, %v206
    %208 = vmatmul.bf16.gmra.mxu0 %v108
    %v209 = vpop.f32.mrf.mxu0
    %v210 = vadd.f32 %v130, %v209
    %v211 = vpop.f32.mrf.mxu0
    %v212 = vadd.f32 %v130, %v211
    %213 = vmatmul.bf16.gmra.mxu0 %v109
    %v214 = vpop.f32.mrf.mxu0
    %v215 = vadd.f32 %v130, %v214
    %v216 = vpop.f32.mrf.mxu0
    %v217 = vadd.f32 %v130, %v216
    %218 = vmatmul.bf16.gmra.mxu0 %v110
    %v219 = vpop.f32.mrf.mxu0
    %v220 = vadd.f32 %v130, %v219
    %v221 = vpop.f32.mrf.mxu0
    %v222 = vadd.f32 %v130, %v221
    %223 = vmatmul.bf16.gmra.mxu0 %v111
    %v224 = vpop.f32.mrf.mxu0
    %v225 = vadd.f32 %v130, %v224
    %v226 = vpop.f32.mrf.mxu0
    %v227 = vadd.f32 %v130, %v226
    %228 = vdwg.mxu0
    %v229 = vmul.f32 %v190, 0.5
    %v230 = vmul.f32 %v192, 0.5
    %v231 = vmul.f32 %v195, 0.5
    %v232 = vmul.f32 %v197, 0.5
    %v233 = vmul.f32 %v200, 0.5
    %v234 = vmul.f32 %v202, 0.5
    %v235 = vmul.f32 %v205, 0.5
    %v236 = vmul.f32 %v207, 0.5
    %v237 = vmul.f32 %v210, 0.5
    %v238 = vmul.f32 %v212, 0.5
    %v239 = vmul.f32 %v215, 0.5
    %v240 = vmul.f32 %v217, 0.5
    %v241 = vmul.f32 %v220, 0.5
    %v242 = vmul.f32 %v222, 0.5
    %v243 = vmul.f32 %v225, 0.5
    %v244 = vmul.f32 %v227, 0.5
    %v245 = vmul.f32 %v190, 0.70710677
    %v246 = vmul.f32 %v192, 0.70710677
    %v247 = vmul.f32 %v195, 0.70710677
    %v248 = vmul.f32 %v197, 0.70710677
    %v249 = vmul.f32 %v200, 0.70710677
    %v250 = vmul.f32 %v202, 0.70710677
    %v251 = vmul.f32 %v205, 0.70710677
    %v252 = vmul.f32 %v207, 0.70710677
    %v253 = vmul.f32 %v210, 0.70710677
    %v254 = vmul.f32 %v212, 0.70710677
    %v255 = vmul.f32 %v215, 0.70710677
    %v256 = vmul.f32 %v217, 0.70710677
    %v257 = vmul.f32 %v220, 0.70710677
    %v258 = vmul.f32 %v222, 0.70710677
    %v259 = vmul.f32 %v225, 0.70710677
    %v260 = vmul.f32 %v227, 0.70710677
    %v261 = vmul.f32 %v245, %v245
    %v262 = vmin.f32 16.0, %v261
    %v263 = vmul.f32 %v262, 2.1237322e-06
    %v264 = vadd.f32 %v263, 0.00028619796
    %v265 = vmul.f32 %v262, %v264
    %v266 = vadd.f32 %v265, 0.0036580483
    %v267 = vmul.f32 %v262, %v266
    %v268 = vadd.f32 %v267, 0.05243302
    %v269 = vmul.f32 %v262, %v268
    %v270 = vadd.f32 %v269, 0.18741608
    %v271 = vmul.f32 %v262, %v270
    %v272 = vadd.f32 %v271, 1.1283791
    %v273 = vmul.f32 %v245, %v272
    %v274 = vmul.f32 %v262, 3.8918573e-05
    %v275 = vadd.f32 %v274, 0.001143296
    %v276 = vmul.f32 %v262, %v275
    %v277 = vadd.f32 %v276, 0.014752088
    %v278 = vmul.f32 %v262, %v277
    %v279 = vadd.f32 %v278, 0.112945676
    %v280 = vmul.f32 %v262, %v279
    %v281 = vadd.f32 %v280, 0.4994258
    %v282 = vmul.f32 %v262, %v281
    %v283 = vadd.f32 %v282, 1.0
    %v284 = vrcp.pop %v283
    %v285 = vmul.f32 %v283, %v284
    %v286 = vsub.f32 1.0, %v285
    %v287 = vmul.f32 %v284, %v286
    %v288 = vadd.f32 %v284, %v287
    %vm289 = vweird.f32 %v283
    %vm290 = vweird.f32 %v284
    %vm291 = vmor %vm289, %vm290
    %v292 = vsel %vm291, %v284, %v288
    %v293 = vand.u32 2147483647, %v283
    %vm294 = vcmp.eq.f32.partialorder %v293, 8.507059e+37
    %v295 = vand.u32 %v283, 2147483648
    %v296 = vor.u32 1.1754944e-38, %v295
    %v297 = vsel %vm294, %v296, %v292
    %v298 = vmul.f32 %v273, %v297
    %v299 = vmin.f32 %v298, 1.0
    %v300 = vmax.f32 %v299, -1.0
    %v301 = vmul.f32 %v246, %v246
    %v302 = vmin.f32 16.0, %v301
    %v303 = vmul.f32 %v302, 2.1237322e-06
    %v304 = vadd.f32 %v303, 0.00028619796
    %v305 = vmul.f32 %v302, %v304
    %v306 = vadd.f32 %v305, 0.0036580483
    %v307 = vmul.f32 %v302, %v306
    %v308 = vadd.f32 %v307, 0.05243302
    %v309 = vmul.f32 %v302, %v308
    %v310 = vadd.f32 %v309, 0.18741608
    %v311 = vmul.f32 %v302, %v310
    %v312 = vadd.f32 %v311, 1.1283791
    %v313 = vmul.f32 %v246, %v312
    %v314 = vmul.f32 %v302, 3.8918573e-05
    %v315 = vadd.f32 %v314, 0.001143296
    %v316 = vmul.f32 %v302, %v315
    %v317 = vadd.f32 %v316, 0.014752088
    %v318 = vmul.f32 %v302, %v317
    %v319 = vadd.f32 %v318, 0.112945676
    %v320 = vmul.f32 %v302, %v319
    %v321 = vadd.f32 %v320, 0.4994258
    %v322 = vmul.f32 %v302, %v321
    %v323 = vadd.f32 %v322, 1.0
    %v324 = vrcp.pop %v323
    %v325 = vmul.f32 %v323, %v324
    %v326 = vsub.f32 1.0, %v325
    %v327 = vmul.f32 %v324, %v326
    %v328 = vadd.f32 %v324, %v327
    %vm329 = vweird.f32 %v323
    %vm330 = vweird.f32 %v324
    %vm331 = vmor %vm329, %vm330
    %v332 = vsel %vm331, %v324, %v328
    %v333 = vand.u32 2147483647, %v323
    %vm334 = vcmp.eq.f32.partialorder %v333, 8.507059e+37
    %v335 = vand.u32 %v323, 2147483648
    %v336 = vor.u32 1.1754944e-38, %v335
    %v337 = vsel %vm334, %v336, %v332
    %v338 = vmul.f32 %v313, %v337
    %v339 = vmin.f32 %v338, 1.0
    %v340 = vmax.f32 %v339, -1.0
    %v341 = vmul.f32 %v247, %v247
    %v342 = vmin.f32 16.0, %v341
    %v343 = vmul.f32 %v342, 2.1237322e-06
    %v344 = vadd.f32 %v343, 0.00028619796
    %v345 = vmul.f32 %v342, %v344
    %v346 = vadd.f32 %v345, 0.0036580483
    %v347 = vmul.f32 %v342, %v346
    %v348 = vadd.f32 %v347, 0.05243302
    %v349 = vmul.f32 %v342, %v348
    %v350 = vadd.f32 %v349, 0.18741608
    %v351 = vmul.f32 %v342, %v350
    %v352 = vadd.f32 %v351, 1.1283791
    %v353 = vmul.f32 %v247, %v352
    %v354 = vmul.f32 %v342, 3.8918573e-05
    %v355 = vadd.f32 %v354, 0.001143296
    %v356 = vmul.f32 %v342, %v355
    %v357 = vadd.f32 %v356, 0.014752088
    %v358 = vmul.f32 %v342, %v357
    %v359 = vadd.f32 %v358, 0.112945676
    %v360 = vmul.f32 %v342, %v359
    %v361 = vadd.f32 %v360, 0.4994258
    %v362 = vmul.f32 %v342, %v361
    %v363 = vadd.f32 %v362, 1.0
    %v364 = vrcp.pop %v363
    %v365 = vmul.f32 %v363, %v364
    %v366 = vsub.f32 1.0, %v365
    %v367 = vmul.f32 %v364, %v366
    %v368 = vadd.f32 %v364, %v367
    %vm369 = vweird.f32 %v363
    %vm370 = vweird.f32 %v364
    %vm371 = vmor %vm369, %vm370
    %v372 = vsel %vm371, %v364, %v368
    %v373 = vand.u32 2147483647, %v363
    %vm374 = vcmp.eq.f32.partialorder %v373, 8.507059e+37
    %v375 = vand.u32 %v363, 2147483648
    %v376 = vor.u32 1.1754944e-38, %v375
    %v377 = vsel %vm374, %v376, %v372
    %v378 = vmul.f32 %v353, %v377
    %v379 = vmin.f32 %v378, 1.0
    %v380 = vmax.f32 %v379, -1.0
    %v381 = vmul.f32 %v248, %v248
    %v382 = vmin.f32 16.0, %v381
    %v383 = vmul.f32 %v382, 2.1237322e-06
    %v384 = vadd.f32 %v383, 0.00028619796
    %v385 = vmul.f32 %v382, %v384
    %v386 = vadd.f32 %v385, 0.0036580483
    %v387 = vmul.f32 %v382, %v386
    %v388 = vadd.f32 %v387, 0.05243302
    %v389 = vmul.f32 %v382, %v388
    %v390 = vadd.f32 %v389, 0.18741608
    %v391 = vmul.f32 %v382, %v390
    %v392 = vadd.f32 %v391, 1.1283791
    %v393 = vmul.f32 %v248, %v392
    %v394 = vmul.f32 %v382, 3.8918573e-05
    %v395 = vadd.f32 %v394, 0.001143296
    %v396 = vmul.f32 %v382, %v395
    %v397 = vadd.f32 %v396, 0.014752088
    %v398 = vmul.f32 %v382, %v397
    %v399 = vadd.f32 %v398, 0.112945676
    %v400 = vmul.f32 %v382, %v399
    %v401 = vadd.f32 %v400, 0.4994258
    %v402 = vmul.f32 %v382, %v401
    %v403 = vadd.f32 %v402, 1.0
    %v404 = vrcp.pop %v403
    %v405 = vmul.f32 %v403, %v404
    %v406 = vsub.f32 1.0, %v405
    %v407 = vmul.f32 %v404, %v406
    %v408 = vadd.f32 %v404, %v407
    %vm409 = vweird.f32 %v403
    %vm410 = vweird.f32 %v404
    %vm411 = vmor %vm409, %vm410
    %v412 = vsel %vm411, %v404, %v408
    %v413 = vand.u32 2147483647, %v403
    %vm414 = vcmp.eq.f32.partialorder %v413, 8.507059e+37
    %v415 = vand.u32 %v403, 2147483648
    %v416 = vor.u32 1.1754944e-38, %v415
    %v417 = vsel %vm414, %v416, %v412
    %v418 = vmul.f32 %v393, %v417
    %v419 = vmin.f32 %v418, 1.0
    %v420 = vmax.f32 %v419, -1.0
    %v421 = vmul.f32 %v249, %v249
    %v422 = vmin.f32 16.0, %v421
    %v423 = vmul.f32 %v422, 2.1237322e-06
    %v424 = vadd.f32 %v423, 0.00028619796
    %v425 = vmul.f32 %v422, %v424
    %v426 = vadd.f32 %v425, 0.0036580483
    %v427 = vmul.f32 %v422, %v426
    %v428 = vadd.f32 %v427, 0.05243302
    %v429 = vmul.f32 %v422, %v428
    %v430 = vadd.f32 %v429, 0.18741608
    %v431 = vmul.f32 %v422, %v430
    %v432 = vadd.f32 %v431, 1.1283791
    %v433 = vmul.f32 %v249, %v432
    %v434 = vmul.f32 %v422, 3.8918573e-05
    %v435 = vadd.f32 %v434, 0.001143296
    %v436 = vmul.f32 %v422, %v435
    %v437 = vadd.f32 %v436, 0.014752088
    %v438 = vmul.f32 %v422, %v437
    %v439 = vadd.f32 %v438, 0.112945676
    %v440 = vmul.f32 %v422, %v439
    %v441 = vadd.f32 %v440, 0.4994258
    %v442 = vmul.f32 %v422, %v441
    %v443 = vadd.f32 %v442, 1.0
    %v444 = vrcp.pop %v443
    %v445 = vmul.f32 %v443, %v444
    %v446 = vsub.f32 1.0, %v445
    %v447 = vmul.f32 %v444, %v446
    %v448 = vadd.f32 %v444, %v447
    %vm449 = vweird.f32 %v443
    %vm450 = vweird.f32 %v444
    %vm451 = vmor %vm449, %vm450
    %v452 = vsel %vm451, %v444, %v448
    %v453 = vand.u32 2147483647, %v443
    %vm454 = vcmp.eq.f32.partialorder %v453, 8.507059e+37
    %v455 = vand.u32 %v443, 2147483648
    %v456 = vor.u32 1.1754944e-38, %v455
    %v457 = vsel %vm454, %v456, %v452
    %v458 = vmul.f32 %v433, %v457
    %v459 = vmin.f32 %v458, 1.0
    %v460 = vmax.f32 %v459, -1.0
    %v461 = vmul.f32 %v250, %v250
    %v462 = vmin.f32 16.0, %v461
    %v463 = vmul.f32 %v462, 2.1237322e-06
    %v464 = vadd.f32 %v463, 0.00028619796
    %v465 = vmul.f32 %v462, %v464
    %v466 = vadd.f32 %v465, 0.0036580483
    %v467 = vmul.f32 %v462, %v466
    %v468 = vadd.f32 %v467, 0.05243302
    %v469 = vmul.f32 %v462, %v468
    %v470 = vadd.f32 %v469, 0.18741608
    %v471 = vmul.f32 %v462, %v470
    %v472 = vadd.f32 %v471, 1.1283791
    %v473 = vmul.f32 %v250, %v472
    %v474 = vmul.f32 %v462, 3.8918573e-05
    %v475 = vadd.f32 %v474, 0.001143296
    %v476 = vmul.f32 %v462, %v475
    %v477 = vadd.f32 %v476, 0.014752088
    %v478 = vmul.f32 %v462, %v477
    %v479 = vadd.f32 %v478, 0.112945676
    %v480 = vmul.f32 %v462, %v479
    %v481 = vadd.f32 %v480, 0.4994258
    %v482 = vmul.f32 %v462, %v481
    %v483 = vadd.f32 %v482, 1.0
    %v484 = vrcp.pop %v483
    %v485 = vmul.f32 %v483, %v484
    %v486 = vsub.f32 1.0, %v485
    %v487 = vmul.f32 %v484, %v486
    %v488 = vadd.f32 %v484, %v487
    %vm489 = vweird.f32 %v483
    %vm490 = vweird.f32 %v484
    %vm491 = vmor %vm489, %vm490
    %v492 = vsel %vm491, %v484, %v488
    %v493 = vand.u32 2147483647, %v483
    %vm494 = vcmp.eq.f32.partialorder %v493, 8.507059e+37
    %v495 = vand.u32 %v483, 2147483648
    %v496 = vor.u32 1.1754944e-38, %v495
    %v497 = vsel %vm494, %v496, %v492
    %v498 = vmul.f32 %v473, %v497
    %v499 = vmin.f32 %v498, 1.0
    %v500 = vmax.f32 %v499, -1.0
    %v501 = vmul.f32 %v251, %v251
    %v502 = vmin.f32 16.0, %v501
    %v503 = vmul.f32 %v502, 2.1237322e-06
    %v504 = vadd.f32 %v503, 0.00028619796
    %v505 = vmul.f32 %v502, %v504
    %v506 = vadd.f32 %v505, 0.0036580483
    %v507 = vmul.f32 %v502, %v506
    %v508 = vadd.f32 %v507, 0.05243302
    %v509 = vmul.f32 %v502, %v508
    %v510 = vadd.f32 %v509, 0.18741608
    %v511 = vmul.f32 %v502, %v510
    %v512 = vadd.f32 %v511, 1.1283791
    %v513 = vmul.f32 %v251, %v512
    %v514 = vmul.f32 %v502, 3.8918573e-05
    %v515 = vadd.f32 %v514, 0.001143296
    %v516 = vmul.f32 %v502, %v515
    %v517 = vadd.f32 %v516, 0.014752088
    %v518 = vmul.f32 %v502, %v517
    %v519 = vadd.f32 %v518, 0.112945676
    %v520 = vmul.f32 %v502, %v519
    %v521 = vadd.f32 %v520, 0.4994258
    %v522 = vmul.f32 %v502, %v521
    %v523 = vadd.f32 %v522, 1.0
    %v524 = vrcp.pop %v523
    %v525 = vmul.f32 %v523, %v524
    %v526 = vsub.f32 1.0, %v525
    %v527 = vmul.f32 %v524, %v526
    %v528 = vadd.f32 %v524, %v527
    %vm529 = vweird.f32 %v523
    %vm530 = vweird.f32 %v524
    %vm531 = vmor %vm529, %vm530
    %v532 = vsel %vm531, %v524, %v528
    %v533 = vand.u32 2147483647, %v523
    %vm534 = vcmp.eq.f32.partialorder %v533, 8.507059e+37
    %v535 = vand.u32 %v523, 2147483648
    %v536 = vor.u32 1.1754944e-38, %v535
    %v537 = vsel %vm534, %v536, %v532
    %v538 = vmul.f32 %v513, %v537
    %v539 = vmin.f32 %v538, 1.0
    %v540 = vmax.f32 %v539, -1.0
    %v541 = vmul.f32 %v252, %v252
    %v542 = vmin.f32 16.0, %v541
    %v543 = vmul.f32 %v542, 2.1237322e-06
    %v544 = vadd.f32 %v543, 0.00028619796
    %v545 = vmul.f32 %v542, %v544
    %v546 = vadd.f32 %v545, 0.0036580483
    %v547 = vmul.f32 %v542, %v546
    %v548 = vadd.f32 %v547, 0.05243302
    %v549 = vmul.f32 %v542, %v548
    %v550 = vadd.f32 %v549, 0.18741608
    %v551 = vmul.f32 %v542, %v550
    %v552 = vadd.f32 %v551, 1.1283791
    %v553 = vmul.f32 %v252, %v552
    %v554 = vmul.f32 %v542, 3.8918573e-05
    %v555 = vadd.f32 %v554, 0.001143296
    %v556 = vmul.f32 %v542, %v555
    %v557 = vadd.f32 %v556, 0.014752088
    %v558 = vmul.f32 %v542, %v557
    %v559 = vadd.f32 %v558, 0.112945676
    %v560 = vmul.f32 %v542, %v559
    %v561 = vadd.f32 %v560, 0.4994258
    %v562 = vmul.f32 %v542, %v561
    %v563 = vadd.f32 %v562, 1.0
    %v564 = vrcp.pop %v563
    %v565 = vmul.f32 %v563, %v564
    %v566 = vsub.f32 1.0, %v565
    %v567 = vmul.f32 %v564, %v566
    %v568 = vadd.f32 %v564, %v567
    %vm569 = vweird.f32 %v563
    %vm570 = vweird.f32 %v564
    %vm571 = vmor %vm569, %vm570
    %v572 = vsel %vm571, %v564, %v568
    %v573 = vand.u32 2147483647, %v563
    %vm574 = vcmp.eq.f32.partialorder %v573, 8.507059e+37
    %v575 = vand.u32 %v563, 2147483648
    %v576 = vor.u32 1.1754944e-38, %v575
    %v577 = vsel %vm574, %v576, %v572
    %v578 = vmul.f32 %v553, %v577
    %v579 = vmin.f32 %v578, 1.0
    %v580 = vmax.f32 %v579, -1.0
    %v581 = vmul.f32 %v253, %v253
    %v582 = vmin.f32 16.0, %v581
    %v583 = vmul.f32 %v582, 2.1237322e-06
    %v584 = vadd.f32 %v583, 0.00028619796
    %v585 = vmul.f32 %v582, %v584
    %v586 = vadd.f32 %v585, 0.0036580483
    %v587 = vmul.f32 %v582, %v586
    %v588 = vadd.f32 %v587, 0.05243302
    %v589 = vmul.f32 %v582, %v588
    %v590 = vadd.f32 %v589, 0.18741608
    %v591 = vmul.f32 %v582, %v590
    %v592 = vadd.f32 %v591, 1.1283791
    %v593 = vmul.f32 %v253, %v592
    %v594 = vmul.f32 %v582, 3.8918573e-05
    %v595 = vadd.f32 %v594, 0.001143296
    %v596 = vmul.f32 %v582, %v595
    %v597 = vadd.f32 %v596, 0.014752088
    %v598 = vmul.f32 %v582, %v597
    %v599 = vadd.f32 %v598, 0.112945676
    %v600 = vmul.f32 %v582, %v599
    %v601 = vadd.f32 %v600, 0.4994258
    %v602 = vmul.f32 %v582, %v601
    %v603 = vadd.f32 %v602, 1.0
    %v604 = vrcp.pop %v603
    %v605 = vmul.f32 %v603, %v604
    %v606 = vsub.f32 1.0, %v605
    %v607 = vmul.f32 %v604, %v606
    %v608 = vadd.f32 %v604, %v607
    %vm609 = vweird.f32 %v603
    %vm610 = vweird.f32 %v604
    %vm611 = vmor %vm609, %vm610
    %v612 = vsel %vm611, %v604, %v608
    %v613 = vand.u32 2147483647, %v603
    %vm614 = vcmp.eq.f32.partialorder %v613, 8.507059e+37
    %v615 = vand.u32 %v603, 2147483648
    %v616 = vor.u32 1.1754944e-38, %v615
    %v617 = vsel %vm614, %v616, %v612
    %v618 = vmul.f32 %v593, %v617
    %v619 = vmin.f32 %v618, 1.0
    %v620 = vmax.f32 %v619, -1.0
    %v621 = vmul.f32 %v254, %v254
    %v622 = vmin.f32 16.0, %v621
    %v623 = vmul.f32 %v622, 2.1237322e-06
    %v624 = vadd.f32 %v623, 0.00028619796
    %v625 = vmul.f32 %v622, %v624
    %v626 = vadd.f32 %v625, 0.0036580483
    %v627 = vmul.f32 %v622, %v626
    %v628 = vadd.f32 %v627, 0.05243302
    %v629 = vmul.f32 %v622, %v628
    %v630 = vadd.f32 %v629, 0.18741608
    %v631 = vmul.f32 %v622, %v630
    %v632 = vadd.f32 %v631, 1.1283791
    %v633 = vmul.f32 %v254, %v632
    %v634 = vmul.f32 %v622, 3.8918573e-05
    %v635 = vadd.f32 %v634, 0.001143296
    %v636 = vmul.f32 %v622, %v635
    %v637 = vadd.f32 %v636, 0.014752088
    %v638 = vmul.f32 %v622, %v637
    %v639 = vadd.f32 %v638, 0.112945676
    %v640 = vmul.f32 %v622, %v639
    %v641 = vadd.f32 %v640, 0.4994258
    %v642 = vmul.f32 %v622, %v641
    %v643 = vadd.f32 %v642, 1.0
    %v644 = vrcp.pop %v643
    %v645 = vmul.f32 %v643, %v644
    %v646 = vsub.f32 1.0, %v645
    %v647 = vmul.f32 %v644, %v646
    %v648 = vadd.f32 %v644, %v647
    %vm649 = vweird.f32 %v643
    %vm650 = vweird.f32 %v644
    %vm651 = vmor %vm649, %vm650
    %v652 = vsel %vm651, %v644, %v648
    %v653 = vand.u32 2147483647, %v643
    %vm654 = vcmp.eq.f32.partialorder %v653, 8.507059e+37
    %v655 = vand.u32 %v643, 2147483648
    %v656 = vor.u32 1.1754944e-38, %v655
    %v657 = vsel %vm654, %v656, %v652
    %v658 = vmul.f32 %v633, %v657
    %v659 = vmin.f32 %v658, 1.0
    %v660 = vmax.f32 %v659, -1.0
    %v661 = vmul.f32 %v255, %v255
    %v662 = vmin.f32 16.0, %v661
    %v663 = vmul.f32 %v662, 2.1237322e-06
    %v664 = vadd.f32 %v663, 0.00028619796
    %v665 = vmul.f32 %v662, %v664
    %v666 = vadd.f32 %v665, 0.0036580483
    %v667 = vmul.f32 %v662, %v666
    %v668 = vadd.f32 %v667, 0.05243302
    %v669 = vmul.f32 %v662, %v668
    %v670 = vadd.f32 %v669, 0.18741608
    %v671 = vmul.f32 %v662, %v670
    %v672 = vadd.f32 %v671, 1.1283791
    %v673 = vmul.f32 %v255, %v672
    %v674 = vmul.f32 %v662, 3.8918573e-05
    %v675 = vadd.f32 %v674, 0.001143296
    %v676 = vmul.f32 %v662, %v675
    %v677 = vadd.f32 %v676, 0.014752088
    %v678 = vmul.f32 %v662, %v677
    %v679 = vadd.f32 %v678, 0.112945676
    %v680 = vmul.f32 %v662, %v679
    %v681 = vadd.f32 %v680, 0.4994258
    %v682 = vmul.f32 %v662, %v681
    %v683 = vadd.f32 %v682, 1.0
    %v684 = vrcp.pop %v683
    %v685 = vmul.f32 %v683, %v684
    %v686 = vsub.f32 1.0, %v685
    %v687 = vmul.f32 %v684, %v686
    %v688 = vadd.f32 %v684, %v687
    %vm689 = vweird.f32 %v683
    %vm690 = vweird.f32 %v684
    %vm691 = vmor %vm689, %vm690
    %v692 = vsel %vm691, %v684, %v688
    %v693 = vand.u32 2147483647, %v683
    %vm694 = vcmp.eq.f32.partialorder %v693, 8.507059e+37
    %v695 = vand.u32 %v683, 2147483648
    %v696 = vor.u32 1.1754944e-38, %v695
    %v697 = vsel %vm694, %v696, %v692
    %v698 = vmul.f32 %v673, %v697
    %v699 = vmin.f32 %v698, 1.0
    %v700 = vmax.f32 %v699, -1.0
    %v701 = vmul.f32 %v256, %v256
    %v702 = vmin.f32 16.0, %v701
    %v703 = vmul.f32 %v702, 2.1237322e-06
    %v704 = vadd.f32 %v703, 0.00028619796
    %v705 = vmul.f32 %v702, %v704
    %v706 = vadd.f32 %v705, 0.0036580483
    %v707 = vmul.f32 %v702, %v706
    %v708 = vadd.f32 %v707, 0.05243302
    %v709 = vmul.f32 %v702, %v708
    %v710 = vadd.f32 %v709, 0.18741608
    %v711 = vmul.f32 %v702, %v710
    %v712 = vadd.f32 %v711, 1.1283791
    %v713 = vmul.f32 %v256, %v712
    %v714 = vmul.f32 %v702, 3.8918573e-05
    %v715 = vadd.f32 %v714, 0.001143296
    %v716 = vmul.f32 %v702, %v715
    %v717 = vadd.f32 %v716, 0.014752088
    %v718 = vmul.f32 %v702, %v717
    %v719 = vadd.f32 %v718, 0.112945676
    %v720 = vmul.f32 %v702, %v719
    %v721 = vadd.f32 %v720, 0.4994258
    %v722 = vmul.f32 %v702, %v721
    %v723 = vadd.f32 %v722, 1.0
    %v724 = vrcp.pop %v723
    %v725 = vmul.f32 %v723, %v724
    %v726 = vsub.f32 1.0, %v725
    %v727 = vmul.f32 %v724, %v726
    %v728 = vadd.f32 %v724, %v727
    %vm729 = vweird.f32 %v723
    %vm730 = vweird.f32 %v724
    %vm731 = vmor %vm729, %vm730
    %v732 = vsel %vm731, %v724, %v728
    %v733 = vand.u32 2147483647, %v723
    %vm734 = vcmp.eq.f32.partialorder %v733, 8.507059e+37
    %v735 = vand.u32 %v723, 2147483648
    %v736 = vor.u32 1.1754944e-38, %v735
    %v737 = vsel %vm734, %v736, %v732
    %v738 = vmul.f32 %v713, %v737
    %v739 = vmin.f32 %v738, 1.0
    %v740 = vmax.f32 %v739, -1.0
    %v741 = vmul.f32 %v257, %v257
    %v742 = vmin.f32 16.0, %v741
    %v743 = vmul.f32 %v742, 2.1237322e-06
    %v744 = vadd.f32 %v743, 0.00028619796
    %v745 = vmul.f32 %v742, %v744
    %v746 = vadd.f32 %v745, 0.0036580483
    %v747 = vmul.f32 %v742, %v746
    %v748 = vadd.f32 %v747, 0.05243302
    %v749 = vmul.f32 %v742, %v748
    %v750 = vadd.f32 %v749, 0.18741608
    %v751 = vmul.f32 %v742, %v750
    %v752 = vadd.f32 %v751, 1.1283791
    %v753 = vmul.f32 %v257, %v752
    %v754 = vmul.f32 %v742, 3.8918573e-05
    %v755 = vadd.f32 %v754, 0.001143296
    %v756 = vmul.f32 %v742, %v755
    %v757 = vadd.f32 %v756, 0.014752088
    %v758 = vmul.f32 %v742, %v757
    %v759 = vadd.f32 %v758, 0.112945676
    %v760 = vmul.f32 %v742, %v759
    %v761 = vadd.f32 %v760, 0.4994258
    %v762 = vmul.f32 %v742, %v761
    %v763 = vadd.f32 %v762, 1.0
    %v764 = vrcp.pop %v763
    %v765 = vmul.f32 %v763, %v764
    %v766 = vsub.f32 1.0, %v765
    %v767 = vmul.f32 %v764, %v766
    %v768 = vadd.f32 %v764, %v767
    %vm769 = vweird.f32 %v763
    %vm770 = vweird.f32 %v764
    %vm771 = vmor %vm769, %vm770
    %v772 = vsel %vm771, %v764, %v768
    %v773 = vand.u32 2147483647, %v763
    %vm774 = vcmp.eq.f32.partialorder %v773, 8.507059e+37
    %v775 = vand.u32 %v763, 2147483648
    %v776 = vor.u32 1.1754944e-38, %v775
    %v777 = vsel %vm774, %v776, %v772
    %v778 = vmul.f32 %v753, %v777
    %v779 = vmin.f32 %v778, 1.0
    %v780 = vmax.f32 %v779, -1.0
    %v781 = vmul.f32 %v258, %v258
    %v782 = vmin.f32 16.0, %v781
    %v783 = vmul.f32 %v782, 2.1237322e-06
    %v784 = vadd.f32 %v783, 0.00028619796
    %v785 = vmul.f32 %v782, %v784
    %v786 = vadd.f32 %v785, 0.0036580483
    %v787 = vmul.f32 %v782, %v786
    %v788 = vadd.f32 %v787, 0.05243302
    %v789 = vmul.f32 %v782, %v788
    %v790 = vadd.f32 %v789, 0.18741608
    %v791 = vmul.f32 %v782, %v790
    %v792 = vadd.f32 %v791, 1.1283791
    %v793 = vmul.f32 %v258, %v792
    %v794 = vmul.f32 %v782, 3.8918573e-05
    %v795 = vadd.f32 %v794, 0.001143296
    %v796 = vmul.f32 %v782, %v795
    %v797 = vadd.f32 %v796, 0.014752088
    %v798 = vmul.f32 %v782, %v797
    %v799 = vadd.f32 %v798, 0.112945676
    %v800 = vmul.f32 %v782, %v799
    %v801 = vadd.f32 %v800, 0.4994258
    %v802 = vmul.f32 %v782, %v801
    %v803 = vadd.f32 %v802, 1.0
    %v804 = vrcp.pop %v803
    %v805 = vmul.f32 %v803, %v804
    %v806 = vsub.f32 1.0, %v805
    %v807 = vmul.f32 %v804, %v806
    %v808 = vadd.f32 %v804, %v807
    %vm809 = vweird.f32 %v803
    %vm810 = vweird.f32 %v804
    %vm811 = vmor %vm809, %vm810
    %v812 = vsel %vm811, %v804, %v808
    %v813 = vand.u32 2147483647, %v803
    %vm814 = vcmp.eq.f32.partialorder %v813, 8.507059e+37
    %v815 = vand.u32 %v803, 2147483648
    %v816 = vor.u32 1.1754944e-38, %v815
    %v817 = vsel %vm814, %v816, %v812
    %v818 = vmul.f32 %v793, %v817
    %v819 = vmin.f32 %v818, 1.0
    %v820 = vmax.f32 %v819, -1.0
    %v821 = vmul.f32 %v259, %v259
    %v822 = vmin.f32 16.0, %v821
    %v823 = vmul.f32 %v822, 2.1237322e-06
    %v824 = vadd.f32 %v823, 0.00028619796
    %v825 = vmul.f32 %v822, %v824
    %v826 = vadd.f32 %v825, 0.0036580483
    %v827 = vmul.f32 %v822, %v826
    %v828 = vadd.f32 %v827, 0.05243302
    %v829 = vmul.f32 %v822, %v828
    %v830 = vadd.f32 %v829, 0.18741608
    %v831 = vmul.f32 %v822, %v830
    %v832 = vadd.f32 %v831, 1.1283791
    %v833 = vmul.f32 %v259, %v832
    %v834 = vmul.f32 %v822, 3.8918573e-05
    %v835 = vadd.f32 %v834, 0.001143296
    %v836 = vmul.f32 %v822, %v835
    %v837 = vadd.f32 %v836, 0.014752088
    %v838 = vmul.f32 %v822, %v837
    %v839 = vadd.f32 %v838, 0.112945676
    %v840 = vmul.f32 %v822, %v839
    %v841 = vadd.f32 %v840, 0.4994258
    %v842 = vmul.f32 %v822, %v841
    %v843 = vadd.f32 %v842, 1.0
    %v844 = vrcp.pop %v843
    %v845 = vmul.f32 %v843, %v844
    %v846 = vsub.f32 1.0, %v845
    %v847 = vmul.f32 %v844, %v846
    %v848 = vadd.f32 %v844, %v847
    %vm849 = vweird.f32 %v843
    %vm850 = vweird.f32 %v844
    %vm851 = vmor %vm849, %vm850
    %v852 = vsel %vm851, %v844, %v848
    %v853 = vand.u32 2147483647, %v843
    %vm854 = vcmp.eq.f32.partialorder %v853, 8.507059e+37
    %v855 = vand.u32 %v843, 2147483648
    %v856 = vor.u32 1.1754944e-38, %v855
    %v857 = vsel %vm854, %v856, %v852
    %v858 = vmul.f32 %v833, %v857
    %v859 = vmin.f32 %v858, 1.0
    %v860 = vmax.f32 %v859, -1.0
    %v861 = vmul.f32 %v260, %v260
    %v862 = vmin.f32 16.0, %v861
    %v863 = vmul.f32 %v862, 2.1237322e-06
    %v864 = vadd.f32 %v863, 0.00028619796
    %v865 = vmul.f32 %v862, %v864
    %v866 = vadd.f32 %v865, 0.0036580483
    %v867 = vmul.f32 %v862, %v866
    %v868 = vadd.f32 %v867, 0.05243302
    %v869 = vmul.f32 %v862, %v868
    %v870 = vadd.f32 %v869, 0.18741608
    %v871 = vmul.f32 %v862, %v870
    %v872 = vadd.f32 %v871, 1.1283791
    %v873 = vmul.f32 %v260, %v872
    %v874 = vmul.f32 %v862, 3.8918573e-05
    %v875 = vadd.f32 %v874, 0.001143296
    %v876 = vmul.f32 %v862, %v875
    %v877 = vadd.f32 %v876, 0.014752088
    %v878 = vmul.f32 %v862, %v877
    %v879 = vadd.f32 %v878, 0.112945676
    %v880 = vmul.f32 %v862, %v879
    %v881 = vadd.f32 %v880, 0.4994258
    %v882 = vmul.f32 %v862, %v881
    %v883 = vadd.f32 %v882, 1.0
    %v884 = vrcp.pop %v883
    %v885 = vmul.f32 %v883, %v884
    %v886 = vsub.f32 1.0, %v885
    %v887 = vmul.f32 %v884, %v886
    %v888 = vadd.f32 %v884, %v887
    %vm889 = vweird.f32 %v883
    %vm890 = vweird.f32 %v884
    %vm891 = vmor %vm889, %vm890
    %v892 = vsel %vm891, %v884, %v888
    %v893 = vand.u32 2147483647, %v883
    %vm894 = vcmp.eq.f32.partialorder %v893, 8.507059e+37
    %v895 = vand.u32 %v883, 2147483648
    %v896 = vor.u32 1.1754944e-38, %v895
    %v897 = vsel %vm894, %v896, %v892
    %v898 = vmul.f32 %v873, %v897
    %v899 = vmin.f32 %v898, 1.0
    %v900 = vmax.f32 %v899, -1.0
    %v901 = vadd.f32 %v300, 1.0
    %v902 = vadd.f32 %v340, 1.0
    %v903 = vadd.f32 %v380, 1.0
    %v904 = vadd.f32 %v420, 1.0
    %v905 = vadd.f32 %v460, 1.0
    %v906 = vadd.f32 %v500, 1.0
    %v907 = vadd.f32 %v540, 1.0
    %v908 = vadd.f32 %v580, 1.0
    %v909 = vadd.f32 %v620, 1.0
    %v910 = vadd.f32 %v660, 1.0
    %v911 = vadd.f32 %v700, 1.0
    %v912 = vadd.f32 %v740, 1.0
    %v913 = vadd.f32 %v780, 1.0
    %v914 = vadd.f32 %v820, 1.0
    %v915 = vadd.f32 %v860, 1.0
    %v916 = vadd.f32 %v900, 1.0
    %v917 = vmul.f32 %v229, %v901
    %v918 = vmul.f32 %v230, %v902
    %v919 = vmul.f32 %v231, %v903
    %v920 = vmul.f32 %v232, %v904
    %v921 = vmul.f32 %v233, %v905
    %v922 = vmul.f32 %v234, %v906
    %v923 = vmul.f32 %v235, %v907
    %v924 = vmul.f32 %v236, %v908
    %v925 = vmul.f32 %v237, %v909
    %v926 = vmul.f32 %v238, %v910
    %v927 = vmul.f32 %v239, %v911
    %v928 = vmul.f32 %v240, %v912
    %v929 = vmul.f32 %v241, %v913
    %v930 = vmul.f32 %v242, %v914
    %v931 = vmul.f32 %v243, %v915
    %v932 = vmul.f32 %v244, %v916
    %v933 = vld [vmem:[#allocation2] sm:$0xff]
    %v934 = vld [vmem:[#allocation2 + $0x8] sm:$0xff]
    %v935 = vld [vmem:[#allocation2 + $0x10] sm:$0xff]
    %v936 = vld [vmem:[#allocation2 + $0x18] sm:$0xff]
    %v937 = vld [vmem:[#allocation2 + $0x20] sm:$0xff]
    %v938 = vld [vmem:[#allocation2 + $0x28] sm:$0xff]
    %v939 = vld [vmem:[#allocation2 + $0x30] sm:$0xff]
    %v940 = vld [vmem:[#allocation2 + $0x38] sm:$0xff]
    %v941 = vld [vmem:[#allocation2 + $0x40] sm:$0xff]
    %v942 = vld [vmem:[#allocation2 + $0x48] sm:$0xff]
    %v943 = vld [vmem:[#allocation2 + $0x50] sm:$0xff]
    %v944 = vld [vmem:[#allocation2 + $0x58] sm:$0xff]
    %v945 = vld [vmem:[#allocation2 + $0x60] sm:$0xff]
    %v946 = vld [vmem:[#allocation2 + $0x68] sm:$0xff]
    %v947 = vld [vmem:[#allocation2 + $0x70] sm:$0xff]
    %v948 = vld [vmem:[#allocation2 + $0x78] sm:$0xff]
    %v949 = vpack.c.bf16 %v918, %v917
    %v950 = vpack.c.bf16 %v920, %v919
    %v951 = vpack.c.bf16 %v922, %v921
    %v952 = vpack.c.bf16 %v924, %v923
    %v953 = vpack.c.bf16 %v926, %v925
    %v954 = vpack.c.bf16 %v928, %v927
    %v955 = vpack.c.bf16 %v930, %v929
    %v956 = vpack.c.bf16 %v932, %v931
    %v957 = vld [vmem:[#allocation8] sm:$0xf]
    %v958 = vld [vmem:[#allocation8 + $0x4] sm:$0xf]
    %v959 = vld [vmem:[#allocation8 + $0x8] sm:$0xf]
    %v960 = vld [vmem:[#allocation8 + $0xc] sm:$0xf]
    %v961 = vld [vmem:[#allocation8 + $0x10] sm:$0xf]
    %v962 = vld [vmem:[#allocation8 + $0x14] sm:$0xf]
    %v963 = vld [vmem:[#allocation8 + $0x18] sm:$0xf]
    %v964 = vld [vmem:[#allocation8 + $0x1c] sm:$0xf]
    %v965 = vld [vmem:[#allocation8 + $0x20] sm:$0xf]
    %v966 = vld [vmem:[#allocation8 + $0x24] sm:$0xf]
    %v967 = vld [vmem:[#allocation8 + $0x28] sm:$0xf]
    %v968 = vld [vmem:[#allocation8 + $0x2c] sm:$0xf]
    %v969 = vld [vmem:[#allocation8 + $0x30] sm:$0xf]
    %v970 = vld [vmem:[#allocation8 + $0x34] sm:$0xf]
    %v971 = vld [vmem:[#allocation8 + $0x38] sm:$0xf]
    %v972 = vld [vmem:[#allocation8 + $0x3c] sm:$0xf]
    %v989 = vunpack.c.l.b16 %v957
    %v990 = vunpack.c.l.b16 %v958
    %v991 = vunpack.c.l.b16 %v959
    %v992 = vunpack.c.l.b16 %v960
    %v993 = vunpack.c.l.b16 %v961
    %v994 = vunpack.c.l.b16 %v962
    %v995 = vunpack.c.l.b16 %v963
    %v996 = vunpack.c.l.b16 %v964
    %v997 = vunpack.c.l.b16 %v965
    %v998 = vunpack.c.l.b16 %v966
    %v999 = vunpack.c.l.b16 %v967
    %v1000 = vunpack.c.l.b16 %v968
    %v1001 = vunpack.c.l.b16 %v969
    %v1002 = vunpack.c.l.b16 %v970
    %v1003 = vunpack.c.l.b16 %v971
    %v1004 = vunpack.c.l.b16 %v972
    %v1005 = vpack.c.b16 %v990, %v989
    %v1006 = vpack.c.b16 %v992, %v991
    %v1007 = vpack.c.b16 %v994, %v993
    %v1008 = vpack.c.b16 %v996, %v995
    %v1009 = vpack.c.b16 %v998, %v997
    %v1010 = vpack.c.b16 %v1000, %v999
    %v1011 = vpack.c.b16 %v1002, %v1001
    %v1012 = vpack.c.b16 %v1004, %v1003
    %1021 = vmatpush.bf16.msra.mxu0 %v1012
    %1022 = vmatpush.bf16.msra.mxu0 %v1011
    %1023 = vmatpush.bf16.msra.mxu0 %v1010
    %1024 = vmatpush.bf16.msra.mxu0 %v1009
    %1025 = vmatpush.bf16.msra.mxu0 %v1008
    %1026 = vmatpush.bf16.msra.mxu0 %v1007
    %1027 = vmatpush.bf16.msra.mxu0 %v1006
    %1028 = vmatpush.bf16.msra.mxu0 %v1005
    %1029 = vmatmul.bf16.gmra.mxu0 %v949
    %v1030 = vpop.f32.mrf.mxu0
    %v1031 = vadd.f32 0.0, %v1030
    %v1032 = vpop.f32.mrf.mxu0
    %v1033 = vadd.f32 0.0, %v1032
    %1034 = vmatmul.bf16.gmra.mxu0 %v950
    %v1035 = vpop.f32.mrf.mxu0
    %v1036 = vadd.f32 0.0, %v1035
    %v1037 = vpop.f32.mrf.mxu0
    %v1038 = vadd.f32 0.0, %v1037
    %1039 = vmatmul.bf16.gmra.mxu0 %v951
    %v1040 = vpop.f32.mrf.mxu0
    %v1041 = vadd.f32 0.0, %v1040
    %v1042 = vpop.f32.mrf.mxu0
    %v1043 = vadd.f32 0.0, %v1042
    %1044 = vmatmul.bf16.gmra.mxu0 %v952
    %v1045 = vpop.f32.mrf.mxu0
    %v1046 = vadd.f32 0.0, %v1045
    %v1047 = vpop.f32.mrf.mxu0
    %v1048 = vadd.f32 0.0, %v1047
    %1049 = vmatmul.bf16.gmra.mxu0 %v953
    %v1050 = vpop.f32.mrf.mxu0
    %v1051 = vadd.f32 0.0, %v1050
    %v1052 = vpop.f32.mrf.mxu0
    %v1053 = vadd.f32 0.0, %v1052
    %1054 = vmatmul.bf16.gmra.mxu0 %v954
    %v1055 = vpop.f32.mrf.mxu0
    %v1056 = vadd.f32 0.0, %v1055
    %v1057 = vpop.f32.mrf.mxu0
    %v1058 = vadd.f32 0.0, %v1057
    %1059 = vmatmul.bf16.gmra.mxu0 %v955
    %v1060 = vpop.f32.mrf.mxu0
    %v1061 = vadd.f32 0.0, %v1060
    %v1062 = vpop.f32.mrf.mxu0
    %v1063 = vadd.f32 0.0, %v1062
    %1064 = vmatmul.bf16.gmra.mxu0 %v956
    %v1065 = vpop.f32.mrf.mxu0
    %v1066 = vadd.f32 0.0, %v1065
    %v1067 = vpop.f32.mrf.mxu0
    %v1068 = vadd.f32 0.0, %v1067
    %1069 = vdwg.mxu0
    %v1070 = vadd.f32 %v933, %v1031
    %v1071 = vadd.f32 %v934, %v1033
    %v1072 = vadd.f32 %v935, %v1036
    %v1073 = vadd.f32 %v936, %v1038
    %v1074 = vadd.f32 %v937, %v1041
    %v1075 = vadd.f32 %v938, %v1043
    %v1076 = vadd.f32 %v939, %v1046
    %v1077 = vadd.f32 %v940, %v1048
    %v1078 = vadd.f32 %v941, %v1051
    %v1079 = vadd.f32 %v942, %v1053
    %v1080 = vadd.f32 %v943, %v1056
    %v1081 = vadd.f32 %v944, %v1058
    %v1082 = vadd.f32 %v945, %v1061
    %v1083 = vadd.f32 %v946, %v1063
    %v1084 = vadd.f32 %v947, %v1066
    %v1085 = vadd.f32 %v948, %v1068
    %1086 = vst [vmem:[#allocation2] sm:$0xff] %v1070
    %1087 = vst [vmem:[#allocation2 + $0x8] sm:$0xff] %v1071
    %1088 = vst [vmem:[#allocation2 + $0x10] sm:$0xff] %v1072
    %1089 = vst [vmem:[#allocation2 + $0x18] sm:$0xff] %v1073
    %1090 = vst [vmem:[#allocation2 + $0x20] sm:$0xff] %v1074
    %1091 = vst [vmem:[#allocation2 + $0x28] sm:$0xff] %v1075
    %1092 = vst [vmem:[#allocation2 + $0x30] sm:$0xff] %v1076
    %1093 = vst [vmem:[#allocation2 + $0x38] sm:$0xff] %v1077
    %1094 = vst [vmem:[#allocation2 + $0x40] sm:$0xff] %v1078
    %1095 = vst [vmem:[#allocation2 + $0x48] sm:$0xff] %v1079
    %1096 = vst [vmem:[#allocation2 + $0x50] sm:$0xff] %v1080
    %1097 = vst [vmem:[#allocation2 + $0x58] sm:$0xff] %v1081
    %1098 = vst [vmem:[#allocation2 + $0x60] sm:$0xff] %v1082
    %1099 = vst [vmem:[#allocation2 + $0x68] sm:$0xff] %v1083
    %1100 = vst [vmem:[#allocation2 + $0x70] sm:$0xff] %v1084
    %1101 = vst [vmem:[#allocation2 + $0x78] sm:$0xff] %v1085
    // Predicated region
    $region38: #{tpu_custom_call.1} parent=1 // pred_check
      %p1102 = pneg %p68
    $region39: #{tpu_custom_call.1} parent=1 // pred_check_branch
      %1104 = sbr.rel (%p1102) target = $region41
    $region40: #{tpu_custom_call.1} parent=1 // pred_region
      %v1105 = vld [vmem:[#allocation2] sm:$0xff]
      %v1106 = vld [vmem:[#allocation2 + $0x8] sm:$0xff]
      %v1107 = vld [vmem:[#allocation2 + $0x10] sm:$0xff]
      %v1108 = vld [vmem:[#allocation2 + $0x18] sm:$0xff]
      %v1109 = vld [vmem:[#allocation2 + $0x20] sm:$0xff]
      %v1110 = vld [vmem:[#allocation2 + $0x28] sm:$0xff]
      %v1111 = vld [vmem:[#allocation2 + $0x30] sm:$0xff]
      %v1112 = vld [vmem:[#allocation2 + $0x38] sm:$0xff]
      %v1113 = vld [vmem:[#allocation2 + $0x40] sm:$0xff]
      %v1114 = vld [vmem:[#allocation2 + $0x48] sm:$0xff]
      %v1115 = vld [vmem:[#allocation2 + $0x50] sm:$0xff]
      %v1116 = vld [vmem:[#allocation2 + $0x58] sm:$0xff]
      %v1117 = vld [vmem:[#allocation2 + $0x60] sm:$0xff]
      %v1118 = vld [vmem:[#allocation2 + $0x68] sm:$0xff]
      %v1119 = vld [vmem:[#allocation2 + $0x70] sm:$0xff]
      %v1120 = vld [vmem:[#allocation2 + $0x78] sm:$0xff]
      %v1121 = vld [vmem:[%s4] sm:$0x1]
      %v1123 = vperm.slane %v1121, 0
      %v1125 = vadd.f32 %v1105, %v1123
      %v1126 = vadd.f32 %v1106, %v1123
      %v1127 = vadd.f32 %v1107, %v1123
      %v1128 = vadd.f32 %v1108, %v1123
      %v1129 = vadd.f32 %v1109, %v1123
      %v1130 = vadd.f32 %v1110, %v1123
      %v1131 = vadd.f32 %v1111, %v1123
      %v1132 = vadd.f32 %v1112, %v1123
      %v1133 = vadd.f32 %v1113, %v1123
      %v1134 = vadd.f32 %v1114, %v1123
      %v1135 = vadd.f32 %v1115, %v1123
      %v1136 = vadd.f32 %v1116, %v1123
      %v1137 = vadd.f32 %v1117, %v1123
      %v1138 = vadd.f32 %v1118, %v1123
      %v1139 = vadd.f32 %v1119, %v1123
      %v1140 = vadd.f32 %v1120, %v1123
      %1141 = vst [vmem:[#allocation9] sm:$0xff] %v1125
      %1142 = vst [vmem:[#allocation9 + $0x8] sm:$0xff] %v1126
      %1143 = vst [vmem:[#allocation9 + $0x10] sm:$0xff] %v1127
      %1144 = vst [vmem:[#allocation9 + $0x18] sm:$0xff] %v1128
      %1145 = vst [vmem:[#allocation9 + $0x20] sm:$0xff] %v1129
      %1146 = vst [vmem:[#allocation9 + $0x28] sm:$0xff] %v1130
      %1147 = vst [vmem:[#allocation9 + $0x30] sm:$0xff] %v1131
      %1148 = vst [vmem:[#allocation9 + $0x38] sm:$0xff] %v1132
      %1149 = vst [vmem:[#allocation9 + $0x40] sm:$0xff] %v1133
      %1150 = vst [vmem:[#allocation9 + $0x48] sm:$0xff] %v1134
      %1151 = vst [vmem:[#allocation9 + $0x50] sm:$0xff] %v1135
      %1152 = vst [vmem:[#allocation9 + $0x58] sm:$0xff] %v1136
      %1153 = vst [vmem:[#allocation9 + $0x60] sm:$0xff] %v1137
      %1154 = vst [vmem:[#allocation9 + $0x68] sm:$0xff] %v1138
      %1155 = vst [vmem:[#allocation9 + $0x70] sm:$0xff] %v1139
      %1156 = vst [vmem:[#allocation9 + $0x78] sm:$0xff] %v1140
    $region41: #{tpu_custom_call.1} parent=1 // pred_fallthru
      _
    // Predicated region
    $region42: #{tpu_custom_call.1} parent=1 // pred_check
      _
    $region43: #{tpu_custom_call.1} parent=1 // pred_check_branch
      %1158 = sbr.rel (0) target = $region45
    $region44: #{tpu_custom_call.1} parent=1 // pred_region
      %1160 = vsyncadd [#allocation5], 0
      %s1161 = sshll.u32 [#allocation9], 4
      %s1162 = int_to_ptr.vmem [resolvable:$true] %s1161
      %s1163 = sshll.u32 %s5, 4
      %s1164 = int_to_ptr.hbm [resolvable:$true] %s1163
      %1169 = dma.vmem_to_hbm [thread:$0]  %s1162, 2048, %s1164, [#allocation5], 128, 128, 8
    $region45: #{tpu_custom_call.1} parent=1 // pred_fallthru
      _
    // Predicated region
    $region46: #{tpu_custom_call.1} parent=1 // pred_check
      _
    $region47: #{tpu_custom_call.1} parent=1 // pred_check_branch
      %1171 = sbr.rel (0) target = $region49
    $region48: #{tpu_custom_call.1} parent=1 // pred_region
      %1173 = dma.done [#allocation5], 2048
    $region49: #{tpu_custom_call.1} parent=1 // pred_fallthru
      _
    %1174 = vsyncpa [#allocation4], 1
    %1175 = vsyncpa [#allocation7], 1
    %1176 = vsyncpa [#allocation5], 1

</llo_original>
